<compile_context>
chip_gen: v6e
topology: v6e:2x2x1
jax: 0.10.0
libtpu: 0.0.40
codegen_flags: <defaults>
</compile_context>

<pallas_src>
import functools
import math

import jax
import jax.numpy as jnp
from jax import lax
from jax.experimental import pallas as pl
from jax.experimental.pallas import tpu as pltpu


def _round_up(x, m):
    return (x + m - 1) // m * m


def _device_defaults():
    """Generation-aware scoped-VMEM limit and default tile sizes."""
    vmem_cap = None
    try:
        vmem_cap = int(pltpu.get_tpu_info().vmem_capacity_bytes)
    except Exception:
        vmem_cap = None
    if vmem_cap is not None and vmem_cap >= 100 * 1024 * 1024:
        # v5e / v6e: 128 MiB physical VMEM -> larger tiles, generous scoped limit.
        return {"vmem_limit": 96 * 1024 * 1024, "state_tile": 512, "seq_tile": 512}
    # v7x (64 MiB physical per TC) or unknown generation: conservative.
    return {"vmem_limit": 48 * 1024 * 1024, "state_tile": 256, "seq_tile": 512}


# --------------------------- stage 1: projection ---------------------------
def _proj_kernel(hist_ref, wt_ref, b_ref, proj_ref):
    """proj_tile = history_tile @ W.T + b   (wrapper pre-transposes W -> MXU-native)."""
    p = jnp.dot(hist_ref[...], wt_ref[...], preferred_element_type=jnp.float32)
    proj_ref[...] = (p + b_ref[...]).astype(proj_ref.dtype)


# ----------------- stage 2: scores + exact row softmax, seq-tiled -----------------
def _attn_kernel(q_ref, proj_ref, o_ref, *, scale, seq_len, seq_tile):
    j = pl.program_id(1)

    # Fold 1/sqrt(loc_size) into the small (tm, hidden) operand, not the scores.
    q = q_ref[...] * scale
    s = lax.dot_general(
        q,
        proj_ref[...],
        dimension_numbers=(((1,), (1,)), ((), ())),  # contract hidden on both -> no .T
        preferred_element_type=jnp.float32,
    )

    # Scores accumulate into the VMEM-resident output block (constant index over j).
    off = pl.multiple_of(j * seq_tile, seq_tile)
    o_ref[:, pl.ds(off, seq_tile)] = s

    @pl.when(j == pl.num_programs(1) - 1)
    def _():
        scores = o_ref[...]
        col = lax.broadcasted_iota(jnp.int32, scores.shape, 1)
        scores = jnp.where(col < seq_len, scores, -jnp.inf)  # mask padded seq columns
        m = jnp.max(scores, axis=1, keepdims=True)
        e = jnp.exp(scores - m)
        denom = jnp.sum(e, axis=1, keepdims=True)
        r = pl.reciprocal(denom, approx=True)   # EUP slot (otherwise idle)
        r = r * (2.0 - denom * r)               # one Newton step -> ~f32-exact
        o_ref[...] = (e * r).astype(o_ref.dtype)


def attn_general(out_state, history, weight, bias, loc_size, *,
                 state_tile=None, seq_tile=None,
                 compute_dtype=jnp.bfloat16, vmem_limit_bytes=None):
    """Pallas version of Attn.forward (method='general', strategies 'AVE-sdot').

    out_state: (state_len, hidden)   history: (seq_len, hidden)
    weight:    (hidden, hidden)      bias:    (hidden,)
    returns:   (state_len, seq_len) f32 softmax probabilities.
    """
    state_len, hidden = out_state.shape
    seq_len, hidden2 = history.shape
    assert hidden2 == hidden
    scale = 1.0 / math.sqrt(float(loc_size))
    cdt = compute_dtype  # matmul operand / stored-proj dtype (f32 accumulation always)

    defaults = _device_defaults()
    if state_tile is None:
        state_tile = defaults["state_tile"]
    if seq_tile is None:
        seq_tile = defaults["seq_tile"]
    if vmem_limit_bytes is None:
        vmem_limit_bytes = defaults["vmem_limit"]

    # ---- seq-axis tiling: 128-aligned (lane-dense output stores), masked in-kernel ----
    tk = min(seq_tile, _round_up(seq_len, 128))
    seq_padded = _round_up(seq_len, tk)
    n_seq_tiles = seq_padded // tk

    # ---- state-axis tiling: 8-aligned, >=2 tiles when possible (v7x has 2 TCs) ----
    round8 = _round_up(state_len, 8)
    tm = min(state_tile, round8)
    if tm == round8 and round8 >= 16:
        tm = _round_up((round8 + 1) // 2, 8)
    # Cap the resident (tm, seq_padded) f32 output block to ~1/3 of the VMEM limit.
    max_tm = max(8, ((vmem_limit_bytes // 3) // (seq_padded * 4 * 2)) // 8 * 8)
    tm = max(8, min(tm, max_tm))
    m_padded = _round_up(state_len, tm)
    n_state_tiles = m_padded // tm

    # ---- pad inputs (padded seq columns are masked in-kernel; only output is sliced) ----
    hist_p = history
    if seq_padded != seq_len:
        hist_p = jnp.pad(history, ((0, seq_padded - seq_len), (0, 0)))
    q_p = out_state
    if m_padded != state_len:
        q_p = jnp.pad(out_state, ((0, m_padded - state_len), (0, 0)))

    hist_p = hist_p.astype(cdt)
    q_p = q_p.astype(cdt)
    w_t = weight.T.astype(cdt)                      # one-time wrapper transpose
    bias2d = bias.reshape(1, hidden).astype(jnp.float32)

    cparams = pltpu.CompilerParams(
        dimension_semantics=("parallel",),
        vmem_limit_bytes=vmem_limit_bytes,
    )

    # ---------------- stage 1: proj = history @ W.T + b ----------------
    def run_proj(single_buffer_invariants):
        inv_kwargs = (
            {"pipeline_mode": pl.Buffered(1)} if single_buffer_invariants else {}
        )
        return pl.pallas_call(
            _proj_kernel,
            out_shape=jax.ShapeDtypeStruct((seq_padded, hidden), cdt),
            grid=(n_seq_tiles,),
            in_specs=[
                pl.BlockSpec((tk, hidden), lambda i: (i, 0)),
                pl.BlockSpec((hidden, hidden), lambda i: (0, 0), **inv_kwargs),
                pl.BlockSpec((1, hidden), lambda i: (0, 0), **inv_kwargs),
            ],
            out_specs=pl.BlockSpec((tk, hidden), lambda i: (i, 0)),
            compiler_params=cparams,
        )(hist_p, w_t, bias2d)

    try:
        proj = run_proj(True)    # single-buffer invariant weight/bias blocks
    except Exception:
        proj = run_proj(False)   # fallback if this Pallas version rejects Buffered(1)

    # ------- stage 2: seq-tiled scores + exact softmax, state axis parallel -------
    kernel = functools.partial(_attn_kernel, scale=scale, seq_len=seq_len, seq_tile=tk)
    out = pl.pallas_call(
        kernel,
        out_shape=jax.ShapeDtypeStruct((m_padded, seq_padded), jnp.float32),
        grid=(n_state_tiles, n_seq_tiles),
        in_specs=[
            pl.BlockSpec((tm, hidden), lambda i, j: (i, 0)),
            pl.BlockSpec((tk, hidden), lambda i, j: (j, 0)),
        ],
        out_specs=pl.BlockSpec((tm, seq_padded), lambda i, j: (i, 0)),
        compiler_params=pltpu.CompilerParams(
            dimension_semantics=("parallel", "arbitrary"),
            vmem_limit_bytes=vmem_limit_bytes,
        ),
    )(q_p, proj)

    return out[:state_len, :seq_len]


def attn_reference(out_state, history, weight, bias, loc_size):
    proj = history @ weight.T + bias
    scores = (out_state @ proj.T) / math.sqrt(float(loc_size))
    return jax.nn.softmax(scores, axis=1)


if __name__ == "__main__":
    hidden_size = 32
    loc_size = 16
    state_len = 8
    seq_len = 8

    key = jax.random.PRNGKey(0)
    k1, k2, k3, k4 = jax.random.split(key, 4)

    out_state = jax.random.normal(k1, (state_len, hidden_size), dtype=jnp.float32)
    history = jax.random.normal(k2, (seq_len, hidden_size), dtype=jnp.float32)
    # Deterministic nn.Linear(hidden, hidden) parameters (synthetic init).
    bound = 1.0 / math.sqrt(hidden_size)
    weight = jax.random.uniform(
        k3, (hidden_size, hidden_size), minval=-bound, maxval=bound, dtype=jnp.float32
    )
    bias = jax.random.uniform(
        k4, (hidden_size,), minval=-bound, maxval=bound, dtype=jnp.float32
    )

    ref = attn_reference(out_state, history, weight, bias, loc_size)

    # Exact path: f32 matmul operands -> tight tolerance vs. reference.
    out_f32 = jax.block_until_ready(
        attn_general(out_state, history, weight, bias, loc_size,
                     compute_dtype=jnp.float32)
    )
    assert out_f32.shape == (state_len, seq_len)
    assert jnp.allclose(out_f32, ref, atol=1e-5, rtol=1e-5)
    assert jnp.allclose(jnp.sum(out_f32, axis=1), jnp.ones((state_len,)), atol=1e-5)

    # Default path: bf16 matmul operands (f32 accumulation/softmax) -> looser tolerance.
    out_bf16 = jax.block_until_ready(
        attn_general(out_state, history, weight, bias, loc_size)
    )
    assert out_bf16.shape == (state_len, seq_len)
    assert jnp.allclose(out_bf16, ref, atol=2e-2, rtol=2e-2)
    assert jnp.allclose(jnp.sum(out_bf16, axis=1), jnp.ones((state_len,)), atol=1e-3)

    print("KERNEL_OK")
</pallas_src>

<mosaic_0001>
module attributes {stable_mosaic.version = 11 : i64} {
  func.func @_proj_kernel(%arg0: i32, %arg1: memref<128x32xf32, #tpu.memory_space<vmem>>, %arg2: memref<32x32xf32, #tpu.memory_space<vmem>>, %arg3: memref<1x32xf32, #tpu.memory_space<vmem>>, %arg4: memref<128x32xf32, #tpu.memory_space<vmem>>) attributes {dimension_semantics = [#tpu.dimension_semantics<parallel>], iteration_bounds = array<i64: 1>, scalar_prefetch = 0 : i64, scratch_operands = 0 : i64, tpu.core_type = #tpu.core_type<tc>, window_params = [{transform_indices = @transform_0, window_bounds = array<i64: 128, 32>}, {pipeline_mode = #tpu.pipeline_mode<synchronous>, transform_indices = @transform_1, window_bounds = array<i64: 32, 32>}, {pipeline_mode = #tpu.pipeline_mode<synchronous>, transform_indices = @transform_2, window_bounds = array<i64: 1, 32>}, {transform_indices = @transform_3, window_bounds = array<i64: 128, 32>}]} {
    %c0 = arith.constant 0 : index
    %c0_0 = arith.constant 0 : index
    %0 = vector.load %arg1[%c0, %c0_0] : memref<128x32xf32, #tpu.memory_space<vmem>>, vector<128x32xf32>
    %c0_1 = arith.constant 0 : index
    %c0_2 = arith.constant 0 : index
    %1 = vector.load %arg2[%c0_1, %c0_2] : memref<32x32xf32, #tpu.memory_space<vmem>>, vector<32x32xf32>
    %cst = arith.constant dense<0.000000e+00> : vector<128x32xf32>
    %2 = tpu.matmul %0, %1, %cst {dimension_numbers = #tpu.dot_dimension_numbers<[1], [0], [0], [1], [0, 0, 1, 1], [], []>} : vector<128x32xf32>, vector<32x32xf32>, vector<128x32xf32> -> vector<128x32xf32>
    %c0_3 = arith.constant 0 : index
    %c0_4 = arith.constant 0 : index
    %3 = vector.load %arg3[%c0_3, %c0_4] : memref<1x32xf32, #tpu.memory_space<vmem>>, vector<1x32xf32>
    %4 = vector.broadcast %3 : vector<1x32xf32> to vector<128x32xf32>
    %5 = arith.addf %2, %4 : vector<128x32xf32>
    %c0_5 = arith.constant 0 : index
    %c0_6 = arith.constant 0 : index
    %6 = vector.load %arg4[%c0_5, %c0_6] : memref<128x32xf32, #tpu.memory_space<vmem>>, vector<128x32xf32>
    tpu.vector_store %arg4[%c0_5, %c0_6], %5 {strides = array<i32>} : memref<128x32xf32, #tpu.memory_space<vmem>>, vector<128x32xf32>,
    return
  }
  func.func @transform_0(%arg0: i32) -> (i32, i32) {
    %c0_i32 = arith.constant 0 : i32
    %c0_i32_0 = arith.constant 0 : i32
    return %arg0, %c0_i32 : i32, i32
  }
  func.func @transform_1(%arg0: i32) -> (i32, i32) {
    %c0_i32 = arith.constant 0 : i32
    %c0_i32_0 = arith.constant 0 : i32
    %c0_i32_1 = arith.constant 0 : i32
    return %c0_i32, %c0_i32_0 : i32, i32
  }
  func.func @transform_2(%arg0: i32) -> (i32, i32) {
    %c0_i32 = arith.constant 0 : i32
    %c0_i32_0 = arith.constant 0 : i32
    %c0_i32_1 = arith.constant 0 : i32
    return %c0_i32, %c0_i32_0 : i32, i32
  }
  func.func @transform_3(%arg0: i32) -> (i32, i32) {
    %c0_i32 = arith.constant 0 : i32
    %c0_i32_0 = arith.constant 0 : i32
    return %arg0, %c0_i32 : i32, i32
  }
}

module attributes {stable_mosaic.version = 11 : i64} {
  func.func @_proj_kernel(%arg0: i32, %arg1: memref<128x32xf32, #tpu.memory_space<vmem>>, %arg2: memref<32x32xf32, #tpu.memory_space<vmem>>, %arg3: memref<1x32xf32, #tpu.memory_space<vmem>>, %arg4: memref<128x32xf32, #tpu.memory_space<vmem>>) attributes {dimension_semantics = [#tpu.dimension_semantics<parallel>], iteration_bounds = array<i64: 1>, scalar_prefetch = 0 : i64, scratch_operands = 0 : i64, tpu.core_type = #tpu.core_type<tc>, window_params = [{transform_indices = @transform_0, window_bounds = array<i64: 128, 32>}, {pipeline_mode = #tpu.pipeline_mode<synchronous>, transform_indices = @transform_1, window_bounds = array<i64: 32, 32>}, {pipeline_mode = #tpu.pipeline_mode<synchronous>, transform_indices = @transform_2, window_bounds = array<i64: 1, 32>}, {transform_indices = @transform_3, window_bounds = array<i64: 128, 32>}]} {
    %c0 = arith.constant 0 : index
    %c0_0 = arith.constant 0 : index
    %0 = vector.load %arg1[%c0, %c0_0] : memref<128x32xf32, #tpu.memory_space<vmem>>, vector<128x32xf32>
    %c0_1 = arith.constant 0 : index
    %c0_2 = arith.constant 0 : index
    %1 = vector.load %arg2[%c0_1, %c0_2] : memref<32x32xf32, #tpu.memory_space<vmem>>, vector<32x32xf32>
    %cst = arith.constant dense<0.000000e+00> : vector<128x32xf32>
    %2 = tpu.matmul %0, %1, %cst {dimension_numbers = #tpu.dot_dimension_numbers<[1], [0], [0], [1], [0, 0, 1, 1], [], []>} : vector<128x32xf32>, vector<32x32xf32>, vector<128x32xf32> -> vector<128x32xf32>
    %c0_3 = arith.constant 0 : index
    %c0_4 = arith.constant 0 : index
    %3 = vector.load %arg3[%c0_3, %c0_4] : memref<1x32xf32, #tpu.memory_space<vmem>>, vector<1x32xf32>
    %4 = vector.broadcast %3 : vector<1x32xf32> to vector<128x32xf32>
    %5 = arith.addf %2, %4 : vector<128x32xf32>
    %c0_5 = arith.constant 0 : index
    %c0_6 = arith.constant 0 : index
    %6 = vector.load %arg4[%c0_5, %c0_6] : memref<128x32xf32, #tpu.memory_space<vmem>>, vector<128x32xf32>
    tpu.vector_store %arg4[%c0_5, %c0_6], %5 {strides = array<i32>} : memref<128x32xf32, #tpu.memory_space<vmem>>, vector<128x32xf32>,
    return
  }
  func.func @transform_0(%arg0: i32) -> (i32, i32) {
    %c0_i32 = arith.constant 0 : i32
    %c0_i32_0 = arith.constant 0 : i32
    return %arg0, %c0_i32 : i32, i32
  }
  func.func @transform_1(%arg0: i32) -> (i32, i32) {
    %c0_i32 = arith.constant 0 : i32
    %c0_i32_0 = arith.constant 0 : i32
    %c0_i32_1 = arith.constant 0 : i32
    return %c0_i32, %c0_i32_0 : i32, i32
  }
  func.func @transform_2(%arg0: i32) -> (i32, i32) {
    %c0_i32 = arith.constant 0 : i32
    %c0_i32_0 = arith.constant 0 : i32
    %c0_i32_1 = arith.constant 0 : i32
    return %c0_i32, %c0_i32_0 : i32, i32
  }
  func.func @transform_3(%arg0: i32) -> (i32, i32) {
    %c0_i32 = arith.constant 0 : i32
    %c0_i32_0 = arith.constant 0 : i32
    return %arg0, %c0_i32 : i32, i32
  }
}

</mosaic_0001>

<llo_original>
// kernel: tpu_custom_call.1
$region0: #{tpu_custom_call.1}
  #allocation0 [shape = 'u32[]', space=smem, size = 0x4, offset = 0x4, fixed_abs, tag = 'smem constant byte address 0x4 - core index']
  #allocation1 [shape = 'u32[144,128]{1,0:T(1,128)}', space=vmem, size = 0x12000, scoped, tag = 'internal scratch']
  %s0 = inlined_call_operand.vmem [shape: f32[128,32], index: 0, kind: input, shape index: {}]
  %s1 = inlined_call_operand.vmem [shape: f32[32,32], index: 1, kind: input, shape index: {}]
  %s2 = inlined_call_operand.vmem [shape: f32[1,32], index: 2, kind: input, shape index: {}]
  %s3 = inlined_call_operand.vmem [shape: f32[128,32], index: 3, kind: output, shape index: {}]
  %s4 = sld [smem:[#allocation0]]
  $region22: #{tpu_custom_call.1} parent=0
    _
  %s6 = ssub.s32 1, %s4
  %s7 = scalar_select 0, %s6, %s4
  // Predicated region
  $region2: #{tpu_custom_call.1} parent=0 // pred_check
    _
  $region3: #{tpu_custom_call.1} parent=0 // pred_check_branch
    %9 = sbr.rel (0) target = $region5
  $region4: #{tpu_custom_call.1} parent=0 // pred_region
    _
  $region5: #{tpu_custom_call.1} parent=0 // pred_fallthru
    _
  // Predicated region
  $region6: #{tpu_custom_call.1} parent=0 // pred_check
    _
  $region7: #{tpu_custom_call.1} parent=0 // pred_check_branch
    %11 = sbr.rel (0) target = $region9
  $region8: #{tpu_custom_call.1} parent=0 // pred_region
    _
  $region9: #{tpu_custom_call.1} parent=0 // pred_fallthru
    _
  // Predicated region
  $region10: #{tpu_custom_call.1} parent=0 // pred_check
    _
  $region11: #{tpu_custom_call.1} parent=0 // pred_check_branch
    %13 = sbr.rel (0) target = $region13
  $region12: #{tpu_custom_call.1} parent=0 // pred_region
    _
  $region13: #{tpu_custom_call.1} parent=0 // pred_fallthru
    _
  %v14 = vld [vmem:[%s0] sm:$0xff]
  %v15 = vld [vmem:[%s0 + $0x8] sm:$0xff]
  %v16 = vld [vmem:[%s0 + $0x10] sm:$0xff]
  %v17 = vld [vmem:[%s0 + $0x18] sm:$0xff]
  %v18 = vld [vmem:[%s0 + $0x20] sm:$0xff]
  %v19 = vld [vmem:[%s0 + $0x28] sm:$0xff]
  %v20 = vld [vmem:[%s0 + $0x30] sm:$0xff]
  %v21 = vld [vmem:[%s0 + $0x38] sm:$0xff]
  %v22 = vld [vmem:[%s0 + $0x40] sm:$0xff]
  %v23 = vld [vmem:[%s0 + $0x48] sm:$0xff]
  %v24 = vld [vmem:[%s0 + $0x50] sm:$0xff]
  %v25 = vld [vmem:[%s0 + $0x58] sm:$0xff]
  %v26 = vld [vmem:[%s0 + $0x60] sm:$0xff]
  %v27 = vld [vmem:[%s0 + $0x68] sm:$0xff]
  %v28 = vld [vmem:[%s0 + $0x70] sm:$0xff]
  %v29 = vld [vmem:[%s0 + $0x78] sm:$0xff]
  %v30 = vld [vmem:[%s1] sm:$0xff]
  %v31 = vld [vmem:[%s1 + $0x8] sm:$0xff]
  %v32 = vld [vmem:[%s1 + $0x10] sm:$0xff]
  %v33 = vld [vmem:[%s1 + $0x18] sm:$0xff]
  %v34 = vld [vmem:[%s2] sm:$0x1]
  %v36 = vlaneseq
  %v37 = vshrl.u32 %v36, 7
  %v38 = vsub.s32 0, %v37
  %v39 = vrot.slane %v34, %v38
  %vm41 = vcmask 261120
  %v43 = vsel %vm41, %v14, 0
  %v46 = vsel %vm41, %v15, 0
  %v49 = vsel %vm41, %v16, 0
  %v52 = vsel %vm41, %v17, 0
  %v55 = vsel %vm41, %v18, 0
  %v58 = vsel %vm41, %v19, 0
  %v61 = vsel %vm41, %v20, 0
  %v64 = vsel %vm41, %v21, 0
  %v67 = vsel %vm41, %v22, 0
  %v70 = vsel %vm41, %v23, 0
  %v73 = vsel %vm41, %v24, 0
  %v76 = vsel %vm41, %v25, 0
  %v79 = vsel %vm41, %v26, 0
  %v82 = vsel %vm41, %v27, 0
  %v85 = vsel %vm41, %v28, 0
  %v88 = vsel %vm41, %v29, 0
  %90 = vmatprep.subr.mxu0 0.0
  %91 = vmatpush1.msra.mxu0 0.0
  %92 = vmatprep.subr.mxu0 0.0
  %93 = vmatpush1.msra.mxu0 0.0
  %94 = vmatprep.subr.mxu0 0.0
  %95 = vmatpush1.msra.mxu0 0.0
  %96 = vmatprep.subr.mxu0 0.0
  %97 = vmatpush1.msra.mxu0 0.0
  %98 = vmatprep.subr.mxu0 0.0
  %99 = vmatpush1.msra.mxu0 0.0
  %100 = vmatprep.subr.mxu0 0.0
  %101 = vmatpush1.msra.mxu0 0.0
  %102 = vmatprep.subr.mxu0 0.0
  %103 = vmatpush1.msra.mxu0 0.0
  %104 = vmatprep.subr.mxu0 0.0
  %105 = vmatpush1.msra.mxu0 0.0
  %106 = vmatprep.subr.mxu0 0.0
  %107 = vmatpush1.msra.mxu0 0.0
  %108 = vmatprep.subr.mxu0 0.0
  %109 = vmatpush1.msra.mxu0 0.0
  %110 = vmatprep.subr.mxu0 0.0
  %111 = vmatpush1.msra.mxu0 0.0
  %112 = vmatprep.subr.mxu0 0.0
  %113 = vmatpush1.msra.mxu0 0.0
  %114 = vmatprep.subr.mxu0 0.0
  %115 = vmatpush1.msra.mxu0 %v33
  %116 = vmatprep.subr.mxu0 0.0
  %117 = vmatpush1.msra.mxu0 %v32
  %118 = vmatprep.subr.mxu0 0.0
  %119 = vmatpush1.msra.mxu0 %v31
  %120 = vmatprep.subr.mxu0 0.0
  %121 = vmatpush1.msra.mxu0 %v30
  %122 = vmatprep.subr.mxu0 0.0
  %123 = vmatpush2.msra.mxu0 0.0
  %124 = vmatprep.subr.mxu0 0.0
  %125 = vmatpush2.msra.mxu0 0.0
  %126 = vmatprep.subr.mxu0 0.0
  %127 = vmatpush2.msra.mxu0 0.0
  %128 = vmatprep.subr.mxu0 0.0
  %129 = vmatpush2.msra.mxu0 0.0
  %130 = vmatprep.subr.mxu0 0.0
  %131 = vmatpush2.msra.mxu0 0.0
  %132 = vmatprep.subr.mxu0 0.0
  %133 = vmatpush2.msra.mxu0 0.0
  %134 = vmatprep.subr.mxu0 0.0
  %135 = vmatpush2.msra.mxu0 0.0
  %136 = vmatprep.subr.mxu0 0.0
  %137 = vmatpush2.msra.mxu0 0.0
  %138 = vmatprep.subr.mxu0 0.0
  %139 = vmatpush2.msra.mxu0 0.0
  %140 = vmatprep.subr.mxu0 0.0
  %141 = vmatpush2.msra.mxu0 0.0
  %142 = vmatprep.subr.mxu0 0.0
  %143 = vmatpush2.msra.mxu0 0.0
  %144 = vmatprep.subr.mxu0 0.0
  %145 = vmatpush2.msra.mxu0 0.0
  %146 = vmatprep.subr.mxu0 0.0
  %147 = vmatpush2.msra.mxu0 0.0
  %148 = vmatprep.subr.mxu0 0.0
  %149 = vmatpush2.msra.mxu0 0.0
  %150 = vmatprep.subr.mxu0 0.0
  %151 = vmatpush2.msra.mxu0 0.0
  %152 = vmatprep.subr.mxu0 0.0
  %153 = vmatpush2.msra.mxu0 0.0
  %154 = vmatprep.mubr.f32.mxu0 0.0
  %155 = vmatmul.mubr.f32.gmra.mxu0 %v43
  %v156 = vpop.f32.mrf.mxu0
  %v157 = vadd.f32 %v39, %v156
  %v158 = vpop.f32.mrf.mxu0
  %159 = vmatprep.mubr.f32.mxu0 0.0
  %160 = vmatmul.mubr.f32.gmra.mxu0 %v46
  %v161 = vpop.f32.mrf.mxu0
  %v162 = vadd.f32 %v39, %v161
  %v163 = vpop.f32.mrf.mxu0
  %164 = vmatprep.mubr.f32.mxu0 0.0
  %165 = vmatmul.mubr.f32.gmra.mxu0 %v49
  %v166 = vpop.f32.mrf.mxu0
  %v167 = vadd.f32 %v39, %v166
  %v168 = vpop.f32.mrf.mxu0
  %169 = vmatprep.mubr.f32.mxu0 0.0
  %170 = vmatmul.mubr.f32.gmra.mxu0 %v52
  %v171 = vpop.f32.mrf.mxu0
  %v172 = vadd.f32 %v39, %v171
  %v173 = vpop.f32.mrf.mxu0
  %174 = vmatprep.mubr.f32.mxu0 0.0
  %175 = vmatmul.mubr.f32.gmra.mxu0 %v55
  %v176 = vpop.f32.mrf.mxu0
  %v177 = vadd.f32 %v39, %v176
  %v178 = vpop.f32.mrf.mxu0
  %179 = vmatprep.mubr.f32.mxu0 0.0
  %180 = vmatmul.mubr.f32.gmra.mxu0 %v58
  %v181 = vpop.f32.mrf.mxu0
  %v182 = vadd.f32 %v39, %v181
  %v183 = vpop.f32.mrf.mxu0
  %184 = vmatprep.mubr.f32.mxu0 0.0
  %185 = vmatmul.mubr.f32.gmra.mxu0 %v61
  %v186 = vpop.f32.mrf.mxu0
  %v187 = vadd.f32 %v39, %v186
  %v188 = vpop.f32.mrf.mxu0
  %189 = vmatprep.mubr.f32.mxu0 0.0
  %190 = vmatmul.mubr.f32.gmra.mxu0 %v64
  %v191 = vpop.f32.mrf.mxu0
  %v192 = vadd.f32 %v39, %v191
  %v193 = vpop.f32.mrf.mxu0
  %194 = vmatprep.mubr.f32.mxu0 0.0
  %195 = vmatmul.mubr.f32.gmra.mxu0 %v67
  %v196 = vpop.f32.mrf.mxu0
  %v197 = vadd.f32 %v39, %v196
  %v198 = vpop.f32.mrf.mxu0
  %199 = vmatprep.mubr.f32.mxu0 0.0
  %200 = vmatmul.mubr.f32.gmra.mxu0 %v70
  %v201 = vpop.f32.mrf.mxu0
  %v202 = vadd.f32 %v39, %v201
  %v203 = vpop.f32.mrf.mxu0
  %204 = vmatprep.mubr.f32.mxu0 0.0
  %205 = vmatmul.mubr.f32.gmra.mxu0 %v73
  %v206 = vpop.f32.mrf.mxu0
  %v207 = vadd.f32 %v39, %v206
  %v208 = vpop.f32.mrf.mxu0
  %209 = vmatprep.mubr.f32.mxu0 0.0
  %210 = vmatmul.mubr.f32.gmra.mxu0 %v76
  %v211 = vpop.f32.mrf.mxu0
  %v212 = vadd.f32 %v39, %v211
  %v213 = vpop.f32.mrf.mxu0
  %214 = vmatprep.mubr.f32.mxu0 0.0
  %215 = vmatmul.mubr.f32.gmra.mxu0 %v79
  %v216 = vpop.f32.mrf.mxu0
  %v217 = vadd.f32 %v39, %v216
  %v218 = vpop.f32.mrf.mxu0
  %219 = vmatprep.mubr.f32.mxu0 0.0
  %220 = vmatmul.mubr.f32.gmra.mxu0 %v82
  %v221 = vpop.f32.mrf.mxu0
  %v222 = vadd.f32 %v39, %v221
  %v223 = vpop.f32.mrf.mxu0
  %224 = vmatprep.mubr.f32.mxu0 0.0
  %225 = vmatmul.mubr.f32.gmra.mxu0 %v85
  %v226 = vpop.f32.mrf.mxu0
  %v227 = vadd.f32 %v39, %v226
  %v228 = vpop.f32.mrf.mxu0
  %229 = vmatprep.mubr.f32.mxu0 0.0
  %230 = vmatmul.mubr.f32.gmra.mxu0 %v88
  %v231 = vpop.f32.mrf.mxu0
  %v232 = vadd.f32 %v39, %v231
  %v233 = vpop.f32.mrf.mxu0
  %234 = vdwg.mxu0
  %235 = vst.msk [vmem:[%s3] sm:$0xff] %vm41, %v157
  %236 = vst.msk [vmem:[%s3 + $0x8] sm:$0xff] %vm41, %v162
  %237 = vst.msk [vmem:[%s3 + $0x10] sm:$0xff] %vm41, %v167
  %238 = vst.msk [vmem:[%s3 + $0x18] sm:$0xff] %vm41, %v172
  %239 = vst.msk [vmem:[%s3 + $0x20] sm:$0xff] %vm41, %v177
  %240 = vst.msk [vmem:[%s3 + $0x28] sm:$0xff] %vm41, %v182
  %241 = vst.msk [vmem:[%s3 + $0x30] sm:$0xff] %vm41, %v187
  %242 = vst.msk [vmem:[%s3 + $0x38] sm:$0xff] %vm41, %v192
  %243 = vst.msk [vmem:[%s3 + $0x40] sm:$0xff] %vm41, %v197
  %244 = vst.msk [vmem:[%s3 + $0x48] sm:$0xff] %vm41, %v202
  %245 = vst.msk [vmem:[%s3 + $0x50] sm:$0xff] %vm41, %v207
  %246 = vst.msk [vmem:[%s3 + $0x58] sm:$0xff] %vm41, %v212
  %247 = vst.msk [vmem:[%s3 + $0x60] sm:$0xff] %vm41, %v217
  %248 = vst.msk [vmem:[%s3 + $0x68] sm:$0xff] %vm41, %v222
  %249 = vst.msk [vmem:[%s3 + $0x70] sm:$0xff] %vm41, %v227
  %250 = vst.msk [vmem:[%s3 + $0x78] sm:$0xff] %vm41, %v232
  // Predicated region
  $region14: #{tpu_custom_call.1} parent=0 // pred_check
    _
  $region15: #{tpu_custom_call.1} parent=0 // pred_check_branch
    %252 = sbr.rel (0) target = $region17
  $region16: #{tpu_custom_call.1} parent=0 // pred_region
    _
  $region17: #{tpu_custom_call.1} parent=0 // pred_fallthru
    _
  // Predicated region
  $region18: #{tpu_custom_call.1} parent=0 // pred_check
    _
  $region19: #{tpu_custom_call.1} parent=0 // pred_check_branch
    %254 = sbr.rel (0) target = $region21
  $region20: #{tpu_custom_call.1} parent=0 // pred_region
    _
  $region21: #{tpu_custom_call.1} parent=0 // pred_fallthru
    _

// kernel: tpu_custom_call.1
$region0: #{tpu_custom_call.1}
  #allocation0 [shape = 'u32[]', space=smem, size = 0x4, offset = 0x4, fixed_abs, tag = 'smem constant byte address 0x4 - core index']
  #allocation1 [shape = 'u32[144,128]{1,0:T(1,128)}', space=vmem, size = 0x12000, scoped, tag = 'internal scratch']
  %s0 = inlined_call_operand.vmem [shape: f32[128,32], index: 0, kind: input, shape index: {}]
  %s1 = inlined_call_operand.vmem [shape: f32[32,32], index: 1, kind: input, shape index: {}]
  %s2 = inlined_call_operand.vmem [shape: f32[1,32], index: 2, kind: input, shape index: {}]
  %s3 = inlined_call_operand.vmem [shape: f32[128,32], index: 3, kind: output, shape index: {}]
  %s4 = sld [smem:[#allocation0]]
  $region22: #{tpu_custom_call.1} parent=0
    _
  %s6 = ssub.s32 1, %s4
  %s7 = scalar_select 0, %s6, %s4
  // Predicated region
  $region2: #{tpu_custom_call.1} parent=0 // pred_check
    _
  $region3: #{tpu_custom_call.1} parent=0 // pred_check_branch
    %9 = sbr.rel (0) target = $region5
  $region4: #{tpu_custom_call.1} parent=0 // pred_region
    _
  $region5: #{tpu_custom_call.1} parent=0 // pred_fallthru
    _
  // Predicated region
  $region6: #{tpu_custom_call.1} parent=0 // pred_check
    _
  $region7: #{tpu_custom_call.1} parent=0 // pred_check_branch
    %11 = sbr.rel (0) target = $region9
  $region8: #{tpu_custom_call.1} parent=0 // pred_region
    _
  $region9: #{tpu_custom_call.1} parent=0 // pred_fallthru
    _
  // Predicated region
  $region10: #{tpu_custom_call.1} parent=0 // pred_check
    _
  $region11: #{tpu_custom_call.1} parent=0 // pred_check_branch
    %13 = sbr.rel (0) target = $region13
  $region12: #{tpu_custom_call.1} parent=0 // pred_region
    _
  $region13: #{tpu_custom_call.1} parent=0 // pred_fallthru
    _
  %v14 = vld [vmem:[%s0] sm:$0xff]
  %v15 = vld [vmem:[%s0 + $0x8] sm:$0xff]
  %v16 = vld [vmem:[%s0 + $0x10] sm:$0xff]
  %v17 = vld [vmem:[%s0 + $0x18] sm:$0xff]
  %v18 = vld [vmem:[%s0 + $0x20] sm:$0xff]
  %v19 = vld [vmem:[%s0 + $0x28] sm:$0xff]
  %v20 = vld [vmem:[%s0 + $0x30] sm:$0xff]
  %v21 = vld [vmem:[%s0 + $0x38] sm:$0xff]
  %v22 = vld [vmem:[%s0 + $0x40] sm:$0xff]
  %v23 = vld [vmem:[%s0 + $0x48] sm:$0xff]
  %v24 = vld [vmem:[%s0 + $0x50] sm:$0xff]
  %v25 = vld [vmem:[%s0 + $0x58] sm:$0xff]
  %v26 = vld [vmem:[%s0 + $0x60] sm:$0xff]
  %v27 = vld [vmem:[%s0 + $0x68] sm:$0xff]
  %v28 = vld [vmem:[%s0 + $0x70] sm:$0xff]
  %v29 = vld [vmem:[%s0 + $0x78] sm:$0xff]
  %v30 = vld [vmem:[%s1] sm:$0xff]
  %v31 = vld [vmem:[%s1 + $0x8] sm:$0xff]
  %v32 = vld [vmem:[%s1 + $0x10] sm:$0xff]
  %v33 = vld [vmem:[%s1 + $0x18] sm:$0xff]
  %v34 = vld [vmem:[%s2] sm:$0x1]
  %v36 = vlaneseq
  %v37 = vshrl.u32 %v36, 7
  %v38 = vsub.s32 0, %v37
  %v39 = vrot.slane %v34, %v38
  %vm41 = vcmask 261120
  %v43 = vsel %vm41, %v14, 0
  %v46 = vsel %vm41, %v15, 0
  %v49 = vsel %vm41, %v16, 0
  %v52 = vsel %vm41, %v17, 0
  %v55 = vsel %vm41, %v18, 0
  %v58 = vsel %vm41, %v19, 0
  %v61 = vsel %vm41, %v20, 0
  %v64 = vsel %vm41, %v21, 0
  %v67 = vsel %vm41, %v22, 0
  %v70 = vsel %vm41, %v23, 0
  %v73 = vsel %vm41, %v24, 0
  %v76 = vsel %vm41, %v25, 0
  %v79 = vsel %vm41, %v26, 0
  %v82 = vsel %vm41, %v27, 0
  %v85 = vsel %vm41, %v28, 0
  %v88 = vsel %vm41, %v29, 0
  %90 = vmatprep.subr.mxu0 0.0
  %91 = vmatpush1.msra.mxu0 0.0
  %92 = vmatprep.subr.mxu0 0.0
  %93 = vmatpush1.msra.mxu0 0.0
  %94 = vmatprep.subr.mxu0 0.0
  %95 = vmatpush1.msra.mxu0 0.0
  %96 = vmatprep.subr.mxu0 0.0
  %97 = vmatpush1.msra.mxu0 0.0
  %98 = vmatprep.subr.mxu0 0.0
  %99 = vmatpush1.msra.mxu0 0.0
  %100 = vmatprep.subr.mxu0 0.0
  %101 = vmatpush1.msra.mxu0 0.0
  %102 = vmatprep.subr.mxu0 0.0
  %103 = vmatpush1.msra.mxu0 0.0
  %104 = vmatprep.subr.mxu0 0.0
  %105 = vmatpush1.msra.mxu0 0.0
  %106 = vmatprep.subr.mxu0 0.0
  %107 = vmatpush1.msra.mxu0 0.0
  %108 = vmatprep.subr.mxu0 0.0
  %109 = vmatpush1.msra.mxu0 0.0
  %110 = vmatprep.subr.mxu0 0.0
  %111 = vmatpush1.msra.mxu0 0.0
  %112 = vmatprep.subr.mxu0 0.0
  %113 = vmatpush1.msra.mxu0 0.0
  %114 = vmatprep.subr.mxu0 0.0
  %115 = vmatpush1.msra.mxu0 %v33
  %116 = vmatprep.subr.mxu0 0.0
  %117 = vmatpush1.msra.mxu0 %v32
  %118 = vmatprep.subr.mxu0 0.0
  %119 = vmatpush1.msra.mxu0 %v31
  %120 = vmatprep.subr.mxu0 0.0
  %121 = vmatpush1.msra.mxu0 %v30
  %122 = vmatprep.subr.mxu0 0.0
  %123 = vmatpush2.msra.mxu0 0.0
  %124 = vmatprep.subr.mxu0 0.0
  %125 = vmatpush2.msra.mxu0 0.0
  %126 = vmatprep.subr.mxu0 0.0
  %127 = vmatpush2.msra.mxu0 0.0
  %128 = vmatprep.subr.mxu0 0.0
  %129 = vmatpush2.msra.mxu0 0.0
  %130 = vmatprep.subr.mxu0 0.0
  %131 = vmatpush2.msra.mxu0 0.0
  %132 = vmatprep.subr.mxu0 0.0
  %133 = vmatpush2.msra.mxu0 0.0
  %134 = vmatprep.subr.mxu0 0.0
  %135 = vmatpush2.msra.mxu0 0.0
  %136 = vmatprep.subr.mxu0 0.0
  %137 = vmatpush2.msra.mxu0 0.0
  %138 = vmatprep.subr.mxu0 0.0
  %139 = vmatpush2.msra.mxu0 0.0
  %140 = vmatprep.subr.mxu0 0.0
  %141 = vmatpush2.msra.mxu0 0.0
  %142 = vmatprep.subr.mxu0 0.0
  %143 = vmatpush2.msra.mxu0 0.0
  %144 = vmatprep.subr.mxu0 0.0
  %145 = vmatpush2.msra.mxu0 0.0
  %146 = vmatprep.subr.mxu0 0.0
  %147 = vmatpush2.msra.mxu0 0.0
  %148 = vmatprep.subr.mxu0 0.0
  %149 = vmatpush2.msra.mxu0 0.0
  %150 = vmatprep.subr.mxu0 0.0
  %151 = vmatpush2.msra.mxu0 0.0
  %152 = vmatprep.subr.mxu0 0.0
  %153 = vmatpush2.msra.mxu0 0.0
  %154 = vmatprep.mubr.f32.mxu0 0.0
  %155 = vmatmul.mubr.f32.gmra.mxu0 %v43
  %v156 = vpop.f32.mrf.mxu0
  %v157 = vadd.f32 %v39, %v156
  %v158 = vpop.f32.mrf.mxu0
  %159 = vmatprep.mubr.f32.mxu0 0.0
  %160 = vmatmul.mubr.f32.gmra.mxu0 %v46
  %v161 = vpop.f32.mrf.mxu0
  %v162 = vadd.f32 %v39, %v161
  %v163 = vpop.f32.mrf.mxu0
  %164 = vmatprep.mubr.f32.mxu0 0.0
  %165 = vmatmul.mubr.f32.gmra.mxu0 %v49
  %v166 = vpop.f32.mrf.mxu0
  %v167 = vadd.f32 %v39, %v166
  %v168 = vpop.f32.mrf.mxu0
  %169 = vmatprep.mubr.f32.mxu0 0.0
  %170 = vmatmul.mubr.f32.gmra.mxu0 %v52
  %v171 = vpop.f32.mrf.mxu0
  %v172 = vadd.f32 %v39, %v171
  %v173 = vpop.f32.mrf.mxu0
  %174 = vmatprep.mubr.f32.mxu0 0.0
  %175 = vmatmul.mubr.f32.gmra.mxu0 %v55
  %v176 = vpop.f32.mrf.mxu0
  %v177 = vadd.f32 %v39, %v176
  %v178 = vpop.f32.mrf.mxu0
  %179 = vmatprep.mubr.f32.mxu0 0.0
  %180 = vmatmul.mubr.f32.gmra.mxu0 %v58
  %v181 = vpop.f32.mrf.mxu0
  %v182 = vadd.f32 %v39, %v181
  %v183 = vpop.f32.mrf.mxu0
  %184 = vmatprep.mubr.f32.mxu0 0.0
  %185 = vmatmul.mubr.f32.gmra.mxu0 %v61
  %v186 = vpop.f32.mrf.mxu0
  %v187 = vadd.f32 %v39, %v186
  %v188 = vpop.f32.mrf.mxu0
  %189 = vmatprep.mubr.f32.mxu0 0.0
  %190 = vmatmul.mubr.f32.gmra.mxu0 %v64
  %v191 = vpop.f32.mrf.mxu0
  %v192 = vadd.f32 %v39, %v191
  %v193 = vpop.f32.mrf.mxu0
  %194 = vmatprep.mubr.f32.mxu0 0.0
  %195 = vmatmul.mubr.f32.gmra.mxu0 %v67
  %v196 = vpop.f32.mrf.mxu0
  %v197 = vadd.f32 %v39, %v196
  %v198 = vpop.f32.mrf.mxu0
  %199 = vmatprep.mubr.f32.mxu0 0.0
  %200 = vmatmul.mubr.f32.gmra.mxu0 %v70
  %v201 = vpop.f32.mrf.mxu0
  %v202 = vadd.f32 %v39, %v201
  %v203 = vpop.f32.mrf.mxu0
  %204 = vmatprep.mubr.f32.mxu0 0.0
  %205 = vmatmul.mubr.f32.gmra.mxu0 %v73
  %v206 = vpop.f32.mrf.mxu0
  %v207 = vadd.f32 %v39, %v206
  %v208 = vpop.f32.mrf.mxu0
  %209 = vmatprep.mubr.f32.mxu0 0.0
  %210 = vmatmul.mubr.f32.gmra.mxu0 %v76
  %v211 = vpop.f32.mrf.mxu0
  %v212 = vadd.f32 %v39, %v211
  %v213 = vpop.f32.mrf.mxu0
  %214 = vmatprep.mubr.f32.mxu0 0.0
  %215 = vmatmul.mubr.f32.gmra.mxu0 %v79
  %v216 = vpop.f32.mrf.mxu0
  %v217 = vadd.f32 %v39, %v216
  %v218 = vpop.f32.mrf.mxu0
  %219 = vmatprep.mubr.f32.mxu0 0.0
  %220 = vmatmul.mubr.f32.gmra.mxu0 %v82
  %v221 = vpop.f32.mrf.mxu0
  %v222 = vadd.f32 %v39, %v221
  %v223 = vpop.f32.mrf.mxu0
  %224 = vmatprep.mubr.f32.mxu0 0.0
  %225 = vmatmul.mubr.f32.gmra.mxu0 %v85
  %v226 = vpop.f32.mrf.mxu0
  %v227 = vadd.f32 %v39, %v226
  %v228 = vpop.f32.mrf.mxu0
  %229 = vmatprep.mubr.f32.mxu0 0.0
  %230 = vmatmul.mubr.f32.gmra.mxu0 %v88
  %v231 = vpop.f32.mrf.mxu0
  %v232 = vadd.f32 %v39, %v231
  %v233 = vpop.f32.mrf.mxu0
  %234 = vdwg.mxu0
  %235 = vst.msk [vmem:[%s3] sm:$0xff] %vm41, %v157
  %236 = vst.msk [vmem:[%s3 + $0x8] sm:$0xff] %vm41, %v162
  %237 = vst.msk [vmem:[%s3 + $0x10] sm:$0xff] %vm41, %v167
  %238 = vst.msk [vmem:[%s3 + $0x18] sm:$0xff] %vm41, %v172
  %239 = vst.msk [vmem:[%s3 + $0x20] sm:$0xff] %vm41, %v177
  %240 = vst.msk [vmem:[%s3 + $0x28] sm:$0xff] %vm41, %v182
  %241 = vst.msk [vmem:[%s3 + $0x30] sm:$0xff] %vm41, %v187
  %242 = vst.msk [vmem:[%s3 + $0x38] sm:$0xff] %vm41, %v192
  %243 = vst.msk [vmem:[%s3 + $0x40] sm:$0xff] %vm41, %v197
  %244 = vst.msk [vmem:[%s3 + $0x48] sm:$0xff] %vm41, %v202
  %245 = vst.msk [vmem:[%s3 + $0x50] sm:$0xff] %vm41, %v207
  %246 = vst.msk [vmem:[%s3 + $0x58] sm:$0xff] %vm41, %v212
  %247 = vst.msk [vmem:[%s3 + $0x60] sm:$0xff] %vm41, %v217
  %248 = vst.msk [vmem:[%s3 + $0x68] sm:$0xff] %vm41, %v222
  %249 = vst.msk [vmem:[%s3 + $0x70] sm:$0xff] %vm41, %v227
  %250 = vst.msk [vmem:[%s3 + $0x78] sm:$0xff] %vm41, %v232
  // Predicated region
  $region14: #{tpu_custom_call.1} parent=0 // pred_check
    _
  $region15: #{tpu_custom_call.1} parent=0 // pred_check_branch
    %252 = sbr.rel (0) target = $region17
  $region16: #{tpu_custom_call.1} parent=0 // pred_region
    _
  $region17: #{tpu_custom_call.1} parent=0 // pred_fallthru
    _
  // Predicated region
  $region18: #{tpu_custom_call.1} parent=0 // pred_check
    _
  $region19: #{tpu_custom_call.1} parent=0 // pred_check_branch
    %254 = sbr.rel (0) target = $region21
  $region20: #{tpu_custom_call.1} parent=0 // pred_region
    _
  $region21: #{tpu_custom_call.1} parent=0 // pred_fallthru
    _

</llo_original>
